<compile_context>
chip_gen: v7x
topology: tpu7x:2x2x1
jax: 0.10.0
libtpu: 0.0.40
codegen_flags: <defaults>
</compile_context>

<pallas_src>
import jax
import jax.numpy as jnp
from jax.experimental import pallas as pl
from jax.experimental.pallas import tpu as pltpu

PACK = 16       # states packed per lane-row: (B,16) -> (B/16, 256) is zero-copy
LN_EPS = 1e-5   # PyTorch LayerNorm default


def thresholds_kernel(xp_ref, seg_ref, gamma_ref, beta_ref,
                      w1_ref, b1_ref, w2_ref, b2_ref, out_ref):
    """Fused LayerNorm -> Linear -> ReLU -> Linear -> ReLU on packed rows.

    Each row holds PACK independent states side by side along the lane axis.

    xp_ref   : (R, PACK*S)       packed input states
    seg_ref  : (PACK*S, PACK*S)  block-diag ones(S,S)/S (segment mean+broadcast)
    gamma_ref: (1, PACK*S)       LayerNorm scale, tiled PACK times
    beta_ref : (1, PACK*S)       LayerNorm shift, tiled PACK times
    w1_ref   : (PACK*S, PACK*H)  block-diag fc1 weight
    b1_ref   : (1, PACK*H)       fc1 bias, tiled
    w2_ref   : (PACK*H, PACK*T)  block-diag fc3 weight
    b2_ref   : (1, PACK*T)       fc3 bias, tiled
    out_ref  : (R, PACK*T)       packed output thresholds (fully lane-dense)
    """
    x = xp_ref[...].astype(jnp.float32)

    # LayerNorm per 16-lane segment.  One MXU matmul with the block-diagonal
    # ones/S matrix both reduces each state's features and broadcasts the mean
    # back onto its own lanes -- no cross-lane shuffles, no in-kernel reshape.
    mean = jnp.dot(x, seg_ref[...], preferred_element_type=jnp.float32)
    centered = x - mean
    var = jnp.dot(centered * centered, seg_ref[...],
                  preferred_element_type=jnp.float32)
    inv_std = jax.lax.rsqrt(var + LN_EPS)                 # EUP slot
    xn = centered * (inv_std * gamma_ref[...]) + beta_ref[...]

    # fc1 + ReLU, fc3 + ReLU with block-diagonal weights (MXU, f32 accumulate).
    h = jnp.dot(xn, w1_ref[...], preferred_element_type=jnp.float32)
    h = jnp.maximum(h + b1_ref[...], 0.0)
    o = jnp.dot(h, w2_ref[...], preferred_element_type=jnp.float32)
    o = jnp.maximum(o + b2_ref[...], 0.0)

    out_ref[...] = o.astype(out_ref.dtype)


def thresholds_forward(state, gamma, beta, w1, b1, w2, b2, *, batch_tile=8192):
    """state (B, S) -> thresholds (B, T).  Semantics of ThresholdsNetwork.forward."""
    B, S = state.shape
    H = w1.shape[1]
    T = w2.shape[1]
    assert batch_tile % 128 == 0, "batch_tile must be a multiple of 128"

    f32 = jnp.float32
    # ---- packing constants (tiny; constant-folded under jit) ----
    eye = jnp.eye(PACK, dtype=f32)
    seg = jnp.kron(eye, jnp.ones((S, S), f32) / S)            # (PACK*S, PACK*S)
    w1bd = jnp.kron(eye, w1.astype(f32))                      # (PACK*S, PACK*H)
    w2bd = jnp.kron(eye, w2.astype(f32))                      # (PACK*H, PACK*T)
    gamma_t = jnp.tile(jnp.reshape(gamma, (1, S)).astype(f32), (1, PACK))
    beta_t = jnp.tile(jnp.reshape(beta, (1, S)).astype(f32), (1, PACK))
    b1_t = jnp.tile(jnp.reshape(b1, (1, H)).astype(f32), (1, PACK))
    b2_t = jnp.tile(jnp.reshape(b2, (1, T)).astype(f32), (1, PACK))

    # ---- pad batch with zeros (finite through LayerNorm), pack along lanes ----
    gridless = B <= batch_tile
    pad_to = 8 * PACK if gridless else batch_tile   # 8 sublane rows min / full tiles
    Bp = ((B + pad_to - 1) // pad_to) * pad_to
    if Bp != B:
        state = jnp.pad(state, ((0, Bp - B), (0, 0)))

    xp = state.reshape(Bp // PACK, PACK * S)                  # zero-copy reshape
    out_shape = jax.ShapeDtypeStruct((Bp // PACK, PACK * T), state.dtype)
    args = (xp, seg, gamma_t, beta_t, w1bd, b1_t, w2bd, b2_t)

    if gridless:
        # Single invocation, no grid, no auto-pipeliner: whole arrays in VMEM.
        vmem = pl.BlockSpec(memory_space=pltpu.MemorySpace.VMEM)
        out_p = pl.pallas_call(
            thresholds_kernel,
            out_shape=out_shape,
            in_specs=[vmem] * len(args),
            out_specs=vmem,
        )(*args)
    else:
        rows = batch_tile // PACK              # multiple of 8 (sublane aligned)
        const = lambda i: (0, 0)               # weights stay VMEM-resident
        out_p = pl.pallas_call(
            thresholds_kernel,
            out_shape=out_shape,
            grid=(Bp // batch_tile,),
            in_specs=[
                pl.BlockSpec((rows, PACK * S), lambda i: (i, 0)),   # packed states
                pl.BlockSpec((PACK * S, PACK * S), const),          # segment-mean mat
                pl.BlockSpec((1, PACK * S), const),                 # gamma (tiled)
                pl.BlockSpec((1, PACK * S), const),                 # beta (tiled)
                pl.BlockSpec((PACK * S, PACK * H), const),          # fc1 block-diag
                pl.BlockSpec((1, PACK * H), const),                 # fc1 bias
                pl.BlockSpec((PACK * H, PACK * T), const),          # fc3 block-diag
                pl.BlockSpec((1, PACK * T), const),                 # fc3 bias
            ],
            out_specs=pl.BlockSpec((rows, PACK * T), lambda i: (i, 0)),
            compiler_params=pltpu.CompilerParams(
                dimension_semantics=("parallel",)),
        )(*args)

    out = out_p.reshape(Bp, T)                                # zero-copy reshape
    return out[:B] if Bp != B else out


def reference_forward(state, gamma, beta, w1, b1, w2, b2):
    mean = jnp.mean(state, axis=-1, keepdims=True)
    var = jnp.mean((state - mean) ** 2, axis=-1, keepdims=True)
    xn = (state - mean) * jax.lax.rsqrt(var + LN_EPS) * gamma + beta
    h = jnp.maximum(xn @ w1 + b1, 0.0)
    return jnp.maximum(h @ w2 + b2, 0.0)


if __name__ == "__main__":
    # Shapes implied by the module: state_size=16, hidden_size=32,
    # threshold_vector_size=8, batch=8.
    batch, state_size, hidden_size, threshold_size = 8, 16, 32, 8

    key = jax.random.PRNGKey(0)
    k_x, k_w1, k_b1, k_w2, k_b2, k_big = jax.random.split(key, 6)

    state = jax.random.normal(k_x, (batch, state_size), dtype=jnp.float32)

    gamma = jnp.ones((state_size,), dtype=jnp.float32)    # LayerNorm weight init
    beta = jnp.zeros((state_size,), dtype=jnp.float32)    # LayerNorm bias init

    bound1 = 1.0 / (state_size ** 0.5)
    w1 = jax.random.uniform(k_w1, (state_size, hidden_size),
                            minval=-bound1, maxval=bound1, dtype=jnp.float32)
    b1 = jax.random.uniform(k_b1, (hidden_size,),
                            minval=-bound1, maxval=bound1, dtype=jnp.float32)

    bound2 = 1.0 / (hidden_size ** 0.5)
    w2 = jax.random.uniform(k_w2, (hidden_size, threshold_size),
                            minval=-bound2, maxval=bound2, dtype=jnp.float32)
    b2 = jax.random.uniform(k_b2, (threshold_size,),
                            minval=-bound2, maxval=bound2, dtype=jnp.float32)

    # --- Small-batch (gridless, lane-dense packed) path ---
    out = thresholds_forward(state, gamma, beta, w1, b1, w2, b2)
    out = jax.block_until_ready(out)
    ref = reference_forward(state, gamma, beta, w1, b1, w2, b2)
    assert out.shape == (batch, threshold_size)
    assert jnp.allclose(out, ref, atol=1e-4, rtol=1e-4), "small-batch mismatch"

    # --- Gridded path: exercises grid >= 2, "parallel" batch axis, tail padding ---
    big_batch = 2500
    big_state = jax.random.normal(k_big, (big_batch, state_size), dtype=jnp.float32)
    out_big = thresholds_forward(big_state, gamma, beta, w1, b1, w2, b2,
                                 batch_tile=1024)
    out_big = jax.block_until_ready(out_big)
    ref_big = reference_forward(big_state, gamma, beta, w1, b1, w2, b2)
    assert out_big.shape == (big_batch, threshold_size)
    assert jnp.allclose(out_big, ref_big, atol=1e-4, rtol=1e-4), "tiled mismatch"

    print("KERNEL_OK")
</pallas_src>

<mosaic_0001>
module attributes {stable_mosaic.version = 11 : i64} {
  func.func @thresholds_kernel(%arg0: memref<8x256xf32, #tpu.memory_space<vmem>>, %arg1: memref<256x256xf32, #tpu.memory_space<vmem>>, %arg2: memref<1x256xf32, #tpu.memory_space<vmem>>, %arg3: memref<1x256xf32, #tpu.memory_space<vmem>>, %arg4: memref<256x512xf32, #tpu.memory_space<vmem>>, %arg5: memref<1x512xf32, #tpu.memory_space<vmem>>, %arg6: memref<512x128xf32, #tpu.memory_space<vmem>>, %arg7: memref<1x128xf32, #tpu.memory_space<vmem>>, %arg8: memref<8x128xf32, #tpu.memory_space<vmem>>) attributes {dimension_semantics = [], scalar_prefetch = 0 : i64, scratch_operands = 0 : i64, tpu.core_type = #tpu.core_type<tc>} {
    %c0 = arith.constant 0 : index
    %c0_0 = arith.constant 0 : index
    %0 = vector.load %arg0[%c0, %c0_0] : memref<8x256xf32, #tpu.memory_space<vmem>>, vector<8x256xf32>
    %c0_1 = arith.constant 0 : index
    %c0_2 = arith.constant 0 : index
    %1 = vector.load %arg1[%c0_1, %c0_2] : memref<256x256xf32, #tpu.memory_space<vmem>>, vector<256x256xf32>
    %cst = arith.constant dense<0.000000e+00> : vector<8x256xf32>
    %2 = tpu.matmul %0, %1, %cst {dimension_numbers = #tpu.dot_dimension_numbers<[1], [0], [0], [1], [0, 0, 1, 1], [], []>} : vector<8x256xf32>, vector<256x256xf32>, vector<8x256xf32> -> vector<8x256xf32>
    %3 = arith.subf %0, %2 : vector<8x256xf32>
    %4 = arith.mulf %3, %3 : vector<8x256xf32>
    %c0_3 = arith.constant 0 : index
    %c0_4 = arith.constant 0 : index
    %5 = vector.load %arg1[%c0_3, %c0_4] : memref<256x256xf32, #tpu.memory_space<vmem>>, vector<256x256xf32>
    %cst_5 = arith.constant dense<0.000000e+00> : vector<8x256xf32>
    %6 = tpu.matmul %4, %5, %cst_5 {dimension_numbers = #tpu.dot_dimension_numbers<[1], [0], [0], [1], [0, 0, 1, 1], [], []>} : vector<8x256xf32>, vector<256x256xf32>, vector<8x256xf32> -> vector<8x256xf32>
    %cst_6 = arith.constant 9.99999974E-6 : f32
    %7 = vector.broadcast %cst_6 : f32 to vector<8x256xf32>
    %8 = arith.addf %6, %7 : vector<8x256xf32>
    %9 = math.rsqrt %8 : vector<8x256xf32>
    %c0_7 = arith.constant 0 : index
    %c0_8 = arith.constant 0 : index
    %10 = vector.load %arg2[%c0_7, %c0_8] : memref<1x256xf32, #tpu.memory_space<vmem>>, vector<1x256xf32>
    %11 = vector.broadcast %10 : vector<1x256xf32> to vector<8x256xf32>
    %12 = arith.mulf %9, %11 : vector<8x256xf32>
    %13 = arith.mulf %3, %12 : vector<8x256xf32>
    %c0_9 = arith.constant 0 : index
    %c0_10 = arith.constant 0 : index
    %14 = vector.load %arg3[%c0_9, %c0_10] : memref<1x256xf32, #tpu.memory_space<vmem>>, vector<1x256xf32>
    %15 = vector.broadcast %14 : vector<1x256xf32> to vector<8x256xf32>
    %16 = arith.addf %13, %15 : vector<8x256xf32>
    %c0_11 = arith.constant 0 : index
    %c0_12 = arith.constant 0 : index
    %17 = vector.load %arg4[%c0_11, %c0_12] : memref<256x512xf32, #tpu.memory_space<vmem>>, vector<256x512xf32>
    %cst_13 = arith.constant dense<0.000000e+00> : vector<8x512xf32>
    %18 = tpu.matmul %16, %17, %cst_13 {dimension_numbers = #tpu.dot_dimension_numbers<[1], [0], [0], [1], [0, 0, 1, 1], [], []>} : vector<8x256xf32>, vector<256x512xf32>, vector<8x512xf32> -> vector<8x512xf32>
    %c0_14 = arith.constant 0 : index
    %c0_15 = arith.constant 0 : index
    %19 = vector.load %arg5[%c0_14, %c0_15] : memref<1x512xf32, #tpu.memory_space<vmem>>, vector<1x512xf32>
    %20 = vector.broadcast %19 : vector<1x512xf32> to vector<8x512xf32>
    %21 = arith.addf %18, %20 : vector<8x512xf32>
    %cst_16 = arith.constant 0.000000e+00 : f32
    %22 = vector.broadcast %cst_16 : f32 to vector<8x512xf32>
    %23 = arith.maximumf %21, %22 : vector<8x512xf32>
    %c0_17 = arith.constant 0 : index
    %c0_18 = arith.constant 0 : index
    %24 = vector.load %arg6[%c0_17, %c0_18] : memref<512x128xf32, #tpu.memory_space<vmem>>, vector<512x128xf32>
    %cst_19 = arith.constant dense<0.000000e+00> : vector<8x128xf32>
    %25 = tpu.matmul %23, %24, %cst_19 {dimension_numbers = #tpu.dot_dimension_numbers<[1], [0], [0], [1], [0, 0, 1, 1], [], []>} : vector<8x512xf32>, vector<512x128xf32>, vector<8x128xf32> -> vector<8x128xf32>
    %c0_20 = arith.constant 0 : index
    %c0_21 = arith.constant 0 : index
    %26 = vector.load %arg7[%c0_20, %c0_21] : memref<1x128xf32, #tpu.memory_space<vmem>>, vector<1x128xf32>
    %27 = vector.broadcast %26 : vector<1x128xf32> to vector<8x128xf32>
    %28 = arith.addf %25, %27 : vector<8x128xf32>
    %cst_22 = arith.constant 0.000000e+00 : f32
    %29 = vector.broadcast %cst_22 : f32 to vector<8x128xf32>
    %30 = arith.maximumf %28, %29 : vector<8x128xf32>
    %c0_23 = arith.constant 0 : index
    %c0_24 = arith.constant 0 : index
    %31 = vector.load %arg8[%c0_23, %c0_24] : memref<8x128xf32, #tpu.memory_space<vmem>>, vector<8x128xf32>
    tpu.vector_store %arg8[%c0_23, %c0_24], %30 {strides = array<i32>} : memref<8x128xf32, #tpu.memory_space<vmem>>, vector<8x128xf32>,
    return
  }
}

</mosaic_0001>

<llo_original>
// kernel: tpu_custom_call.1
$region0: #{tpu_custom_call.1}
  #allocation0 [shape = 'u32[]', space=smem, size = 0x4, offset = 0x4, fixed_abs, tag = 'smem constant byte address 0x4 - core index']
  #allocation1 [shape = 'u32[144,128]{1,0:T(1,128)}', space=vmem, size = 0x12000, scoped, tag = 'internal scratch']
  %s0 = inlined_call_operand.hbm [shape: f32[8,256], index: 0, kind: input, shape index: {}]
  %s1 = inlined_call_operand.hbm [shape: f32[256,256], index: 1, kind: input, shape index: {}]
  %s2 = inlined_call_operand.vmem [shape: f32[1,256], index: 2, kind: input, shape index: {}]
  %s3 = inlined_call_operand.vmem [shape: f32[1,256], index: 3, kind: input, shape index: {}]
  %s4 = inlined_call_operand.hbm [shape: f32[256,512], index: 4, kind: input, shape index: {}]
  %s5 = inlined_call_operand.vmem [shape: f32[1,512], index: 5, kind: input, shape index: {}]
  %s6 = inlined_call_operand.hbm [shape: f32[512,128], index: 6, kind: input, shape index: {}]
  %s7 = inlined_call_operand.vmem [shape: f32[1,128], index: 7, kind: input, shape index: {}]
  %s8 = inlined_call_operand.hbm [shape: f32[8,128], index: 8, kind: output, shape index: {}]
  %s9 = sld [smem:[#allocation0]]
  $region58: #{tpu_custom_call.1} parent=0
    _
  %s11 = ssub.s32 1, %s9
  %s12 = scalar_select 0, %s11, %s9
  $region1: #{tpu_custom_call.1} parent=0
    #allocation2 [shape = 'u8[8192]{0}', space=vmem, size = 0x2000, scoped, tag = 'input window, operand 0, single buffered']
    #allocation3 [shape = 's32[1]{0}', space=sflag, size = 0x4, scoped, tag = 'scoped memory for tpu_custom_call.1']
    #allocation4 [shape = 's32[1]{0}', space=sflag, size = 0x4, scoped, tag = 'scoped memory for tpu_custom_call.1']
    #allocation5 [shape = 'u8[262144]{0}', space=vmem, size = 0x40000, scoped, tag = 'input window, operand 1, single buffered']
    #allocation6 [shape = 's32[1]{0}', space=sflag, size = 0x4, scoped, tag = 'scoped memory for tpu_custom_call.1']
    #allocation7 [shape = 'u8[524288]{0}', space=vmem, size = 0x80000, scoped, tag = 'input window, operand 4, single buffered']
    #allocation8 [shape = 'u8[262144]{0}', space=vmem, size = 0x40000, scoped, tag = 'input window, operand 6, single buffered']
    #allocation9 [shape = 's32[1]{0}', space=sflag, size = 0x4, scoped, tag = 'scoped memory for tpu_custom_call.1']
    #allocation10 [shape = 'u8[4096]{0}', space=vmem, size = 0x1000, scoped, tag = 'output window, operand 0, single buffered']
    %13 = vsyncpa [#allocation3], 0
    %14 = vsyncpa [#allocation6], 0
    %15 = vsyncpa [#allocation9], 0
    %16 = vsyncpa [#allocation4], 0
    // Predicated region
    $region2: #{tpu_custom_call.1} parent=1 // pred_check
      _
    $region3: #{tpu_custom_call.1} parent=1 // pred_check_branch
      %18 = sbr.rel (0) target = $region5
    $region4: #{tpu_custom_call.1} parent=1 // pred_region
      %s20 = ssub.s32 256, 256
      %21 = vsyncadd [#allocation3], %s20
      %s23 = sshll.u32 [#allocation2], 4
      %s24 = int_to_ptr.vmem [resolvable:$true] %s23
      %26 = dma.hbm_to_vmem [thread:$0]  %s0, 256, %s24, [#allocation3]
    $region5: #{tpu_custom_call.1} parent=1 // pred_fallthru
      _
    // Predicated region
    $region6: #{tpu_custom_call.1} parent=1 // pred_check
      _
    $region7: #{tpu_custom_call.1} parent=1 // pred_check_branch
      %28 = sbr.rel (0) target = $region9
    $region8: #{tpu_custom_call.1} parent=1 // pred_region
      %s30 = ssub.s32 8192, 8192
      %31 = vsyncadd [#allocation6], %s30
      %s32 = sshll.u32 [#allocation5], 4
      %s33 = int_to_ptr.vmem [resolvable:$true] %s32
      %38 = dma.hbm_to_vmem [thread:$0]  %s1, 8192, %s33, [#allocation6], 256, 256, 16
    $region9: #{tpu_custom_call.1} parent=1 // pred_fallthru
      _
    // Predicated region
    $region10: #{tpu_custom_call.1} parent=1 // pred_check
      _
    $region11: #{tpu_custom_call.1} parent=1 // pred_check_branch
      %40 = sbr.rel (0) target = $region13
    $region12: #{tpu_custom_call.1} parent=1 // pred_region
      _
    $region13: #{tpu_custom_call.1} parent=1 // pred_fallthru
      _
    // Predicated region
    $region14: #{tpu_custom_call.1} parent=1 // pred_check
      _
    $region15: #{tpu_custom_call.1} parent=1 // pred_check_branch
      %42 = sbr.rel (0) target = $region17
    $region16: #{tpu_custom_call.1} parent=1 // pred_region
      _
    $region17: #{tpu_custom_call.1} parent=1 // pred_fallthru
      _
    // Predicated region
    $region18: #{tpu_custom_call.1} parent=1 // pred_check
      _
    $region19: #{tpu_custom_call.1} parent=1 // pred_check_branch
      %44 = sbr.rel (0) target = $region21
    $region20: #{tpu_custom_call.1} parent=1 // pred_region
      %s46 = ssub.s32 16384, 16384
      %47 = vsyncadd [#allocation6], %s46
      %s48 = sshll.u32 [#allocation7], 4
      %s49 = int_to_ptr.vmem [resolvable:$true] %s48
      %54 = dma.hbm_to_vmem [thread:$0]  %s4, 16384, %s49, [#allocation6], 512, 512, 32
    $region21: #{tpu_custom_call.1} parent=1 // pred_fallthru
      _
    // Predicated region
    $region22: #{tpu_custom_call.1} parent=1 // pred_check
      _
    $region23: #{tpu_custom_call.1} parent=1 // pred_check_branch
      %56 = sbr.rel (0) target = $region25
    $region24: #{tpu_custom_call.1} parent=1 // pred_region
      _
    $region25: #{tpu_custom_call.1} parent=1 // pred_fallthru
      _
    // Predicated region
    $region26: #{tpu_custom_call.1} parent=1 // pred_check
      _
    $region27: #{tpu_custom_call.1} parent=1 // pred_check_branch
      %58 = sbr.rel (0) target = $region29
    $region28: #{tpu_custom_call.1} parent=1 // pred_region
      %s60 = ssub.s32 8192, 8192
      %61 = vsyncadd [#allocation9], %s60
      %s62 = sshll.u32 [#allocation8], 4
      %s63 = int_to_ptr.vmem [resolvable:$true] %s62
      %68 = dma.hbm_to_vmem [thread:$0]  %s6, 8192, %s63, [#allocation9], 128, 128, 8
    $region29: #{tpu_custom_call.1} parent=1 // pred_fallthru
      _
    // Predicated region
    $region30: #{tpu_custom_call.1} parent=1 // pred_check
      _
    $region31: #{tpu_custom_call.1} parent=1 // pred_check_branch
      %70 = sbr.rel (0) target = $region33
    $region32: #{tpu_custom_call.1} parent=1 // pred_region
      _
    $region33: #{tpu_custom_call.1} parent=1 // pred_fallthru
      _
    // Predicated region
    $region34: #{tpu_custom_call.1} parent=1 // pred_check
      _
    $region35: #{tpu_custom_call.1} parent=1 // pred_check_branch
      %72 = sbr.rel (0) target = $region37
    $region36: #{tpu_custom_call.1} parent=1 // pred_region
      %73 = dma.done [#allocation3], 256
    $region37: #{tpu_custom_call.1} parent=1 // pred_fallthru
      _
    // Predicated region
    $region38: #{tpu_custom_call.1} parent=1 // pred_check
      _
    $region39: #{tpu_custom_call.1} parent=1 // pred_check_branch
      %75 = sbr.rel (0) target = $region41
    $region40: #{tpu_custom_call.1} parent=1 // pred_region
      %76 = dma.done [#allocation6], 8192
    $region41: #{tpu_custom_call.1} parent=1 // pred_fallthru
      _
    // Predicated region
    $region42: #{tpu_custom_call.1} parent=1 // pred_check
      _
    $region43: #{tpu_custom_call.1} parent=1 // pred_check_branch
      %78 = sbr.rel (0) target = $region45
    $region44: #{tpu_custom_call.1} parent=1 // pred_region
      %79 = dma.done [#allocation6], 16384
    $region45: #{tpu_custom_call.1} parent=1 // pred_fallthru
      _
    // Predicated region
    $region46: #{tpu_custom_call.1} parent=1 // pred_check
      _
    $region47: #{tpu_custom_call.1} parent=1 // pred_check_branch
      %81 = sbr.rel (0) target = $region49
    $region48: #{tpu_custom_call.1} parent=1 // pred_region
      %82 = dma.done [#allocation9], 8192
    $region49: #{tpu_custom_call.1} parent=1 // pred_fallthru
      _
    %v83 = vld [vmem:[#allocation2] sm:$0xff]
    %v84 = vld [vmem:[#allocation2 + $0x8] sm:$0xff]
    %v85 = vld [vmem:[#allocation5] sm:$0xff]
    %v86 = vld [vmem:[#allocation5 + $0x8] sm:$0xff]
    %v87 = vld [vmem:[#allocation5 + $0x10] sm:$0xff]
    %v88 = vld [vmem:[#allocation5 + $0x18] sm:$0xff]
    %v89 = vld [vmem:[#allocation5 + $0x20] sm:$0xff]
    %v90 = vld [vmem:[#allocation5 + $0x28] sm:$0xff]
    %v91 = vld [vmem:[#allocation5 + $0x30] sm:$0xff]
    %v92 = vld [vmem:[#allocation5 + $0x38] sm:$0xff]
    %v93 = vld [vmem:[#allocation5 + $0x40] sm:$0xff]
    %v94 = vld [vmem:[#allocation5 + $0x48] sm:$0xff]
    %v95 = vld [vmem:[#allocation5 + $0x50] sm:$0xff]
    %v96 = vld [vmem:[#allocation5 + $0x58] sm:$0xff]
    %v97 = vld [vmem:[#allocation5 + $0x60] sm:$0xff]
    %v98 = vld [vmem:[#allocation5 + $0x68] sm:$0xff]
    %v99 = vld [vmem:[#allocation5 + $0x70] sm:$0xff]
    %v100 = vld [vmem:[#allocation5 + $0x78] sm:$0xff]
    %v101 = vld [vmem:[#allocation5 + $0x80] sm:$0xff]
    %v102 = vld [vmem:[#allocation5 + $0x88] sm:$0xff]
    %v103 = vld [vmem:[#allocation5 + $0x90] sm:$0xff]
    %v104 = vld [vmem:[#allocation5 + $0x98] sm:$0xff]
    %v105 = vld [vmem:[#allocation5 + $0xa0] sm:$0xff]
    %v106 = vld [vmem:[#allocation5 + $0xa8] sm:$0xff]
    %v107 = vld [vmem:[#allocation5 + $0xb0] sm:$0xff]
    %v108 = vld [vmem:[#allocation5 + $0xb8] sm:$0xff]
    %v109 = vld [vmem:[#allocation5 + $0xc0] sm:$0xff]
    %v110 = vld [vmem:[#allocation5 + $0xc8] sm:$0xff]
    %v111 = vld [vmem:[#allocation5 + $0xd0] sm:$0xff]
    %v112 = vld [vmem:[#allocation5 + $0xd8] sm:$0xff]
    %v113 = vld [vmem:[#allocation5 + $0xe0] sm:$0xff]
    %v114 = vld [vmem:[#allocation5 + $0xe8] sm:$0xff]
    %v115 = vld [vmem:[#allocation5 + $0xf0] sm:$0xff]
    %v116 = vld [vmem:[#allocation5 + $0xf8] sm:$0xff]
    %v117 = vld [vmem:[#allocation5 + $0x100] sm:$0xff]
    %v118 = vld [vmem:[#allocation5 + $0x108] sm:$0xff]
    %v119 = vld [vmem:[#allocation5 + $0x110] sm:$0xff]
    %v120 = vld [vmem:[#allocation5 + $0x118] sm:$0xff]
    %v121 = vld [vmem:[#allocation5 + $0x120] sm:$0xff]
    %v122 = vld [vmem:[#allocation5 + $0x128] sm:$0xff]
    %v123 = vld [vmem:[#allocation5 + $0x130] sm:$0xff]
    %v124 = vld [vmem:[#allocation5 + $0x138] sm:$0xff]
    %v125 = vld [vmem:[#allocation5 + $0x140] sm:$0xff]
    %v126 = vld [vmem:[#allocation5 + $0x148] sm:$0xff]
    %v127 = vld [vmem:[#allocation5 + $0x150] sm:$0xff]
    %v128 = vld [vmem:[#allocation5 + $0x158] sm:$0xff]
    %v129 = vld [vmem:[#allocation5 + $0x160] sm:$0xff]
    %v130 = vld [vmem:[#allocation5 + $0x168] sm:$0xff]
    %v131 = vld [vmem:[#allocation5 + $0x170] sm:$0xff]
    %v132 = vld [vmem:[#allocation5 + $0x178] sm:$0xff]
    %v133 = vld [vmem:[#allocation5 + $0x180] sm:$0xff]
    %v134 = vld [vmem:[#allocation5 + $0x188] sm:$0xff]
    %v135 = vld [vmem:[#allocation5 + $0x190] sm:$0xff]
    %v136 = vld [vmem:[#allocation5 + $0x198] sm:$0xff]
    %v137 = vld [vmem:[#allocation5 + $0x1a0] sm:$0xff]
    %v138 = vld [vmem:[#allocation5 + $0x1a8] sm:$0xff]
    %v139 = vld [vmem:[#allocation5 + $0x1b0] sm:$0xff]
    %v140 = vld [vmem:[#allocation5 + $0x1b8] sm:$0xff]
    %v141 = vld [vmem:[#allocation5 + $0x1c0] sm:$0xff]
    %v142 = vld [vmem:[#allocation5 + $0x1c8] sm:$0xff]
    %v143 = vld [vmem:[#allocation5 + $0x1d0] sm:$0xff]
    %v144 = vld [vmem:[#allocation5 + $0x1d8] sm:$0xff]
    %v145 = vld [vmem:[#allocation5 + $0x1e0] sm:$0xff]
    %v146 = vld [vmem:[#allocation5 + $0x1e8] sm:$0xff]
    %v147 = vld [vmem:[#allocation5 + $0x1f0] sm:$0xff]
    %v148 = vld [vmem:[#allocation5 + $0x1f8] sm:$0xff]
    %149 = vmatprep.subr.mxu0 %v86
    %150 = vmatpush1.msra.mxu0 %v85
    %151 = vmatprep.subr.mxu0 %v88
    %152 = vmatpush1.msra.mxu0 %v87
    %153 = vmatprep.subr.mxu0 %v90
    %154 = vmatpush1.msra.mxu0 %v89
    %155 = vmatprep.subr.mxu0 %v92
    %156 = vmatpush1.msra.mxu0 %v91
    %157 = vmatprep.subr.mxu0 %v94
    %158 = vmatpush1.msra.mxu0 %v93
    %159 = vmatprep.subr.mxu0 %v96
    %160 = vmatpush1.msra.mxu0 %v95
    %161 = vmatprep.subr.mxu0 %v98
    %162 = vmatpush1.msra.mxu0 %v97
    %163 = vmatprep.subr.mxu0 %v100
    %164 = vmatpush1.msra.mxu0 %v99
    %165 = vmatprep.subr.mxu0 %v102
    %166 = vmatpush1.msra.mxu0 %v101
    %167 = vmatprep.subr.mxu0 %v104
    %168 = vmatpush1.msra.mxu0 %v103
    %169 = vmatprep.subr.mxu0 %v106
    %170 = vmatpush1.msra.mxu0 %v105
    %171 = vmatprep.subr.mxu0 %v108
    %172 = vmatpush1.msra.mxu0 %v107
    %173 = vmatprep.subr.mxu0 %v110
    %174 = vmatpush1.msra.mxu0 %v109
    %175 = vmatprep.subr.mxu0 %v112
    %176 = vmatpush1.msra.mxu0 %v111
    %177 = vmatprep.subr.mxu0 %v114
    %178 = vmatpush1.msra.mxu0 %v113
    %179 = vmatprep.subr.mxu0 %v116
    %180 = vmatpush1.msra.mxu0 %v115
    %181 = vmatprep.subr.mxu0 %v118
    %182 = vmatpush1.msra.mxu0 %v117
    %183 = vmatprep.subr.mxu0 %v120
    %184 = vmatpush1.msra.mxu0 %v119
    %185 = vmatprep.subr.mxu0 %v122
    %186 = vmatpush1.msra.mxu0 %v121
    %187 = vmatprep.subr.mxu0 %v124
    %188 = vmatpush1.msra.mxu0 %v123
    %189 = vmatprep.subr.mxu0 %v126
    %190 = vmatpush1.msra.mxu0 %v125
    %191 = vmatprep.subr.mxu0 %v128
    %192 = vmatpush1.msra.mxu0 %v127
    %193 = vmatprep.subr.mxu0 %v130
    %194 = vmatpush1.msra.mxu0 %v129
    %195 = vmatprep.subr.mxu0 %v132
    %196 = vmatpush1.msra.mxu0 %v131
    %197 = vmatprep.subr.mxu0 %v134
    %198 = vmatpush1.msra.mxu0 %v133
    %199 = vmatprep.subr.mxu0 %v136
    %200 = vmatpush1.msra.mxu0 %v135
    %201 = vmatprep.subr.mxu0 %v138
    %202 = vmatpush1.msra.mxu0 %v137
    %203 = vmatprep.subr.mxu0 %v140
    %204 = vmatpush1.msra.mxu0 %v139
    %205 = vmatprep.subr.mxu0 %v142
    %206 = vmatpush1.msra.mxu0 %v141
    %207 = vmatprep.subr.mxu0 %v144
    %208 = vmatpush1.msra.mxu0 %v143
    %209 = vmatprep.subr.mxu0 %v146
    %210 = vmatpush1.msra.mxu0 %v145
    %211 = vmatprep.subr.mxu0 %v148
    %212 = vmatpush1.msra.mxu0 %v147
    %213 = vmatprep.mubr.f32.mxu0 %v84
    %214 = vmatmul.mubr.f32.gmra.mrb[0].mxu0 %v83
    %v215 = vpop.f32.mrb[0].mxu0
    %v216 = vadd.f32 0.0, %v215
    %v217 = vpop.f32.mrb[0].mxu0
    %v218 = vadd.f32 0.0, %v217
    %219 = vdwg.mxu0
    %v220 = vsub.f32 %v83, %v216
    %v221 = vsub.f32 %v84, %v218
    %v222 = vmul.f32 %v220, %v220
    %v223 = vmul.f32 %v221, %v221
    %224 = vmatprep.subr.mxu0 %v86
    %225 = vmatpush1.msra.mxu0 %v85
    %226 = vmatprep.subr.mxu0 %v88
    %227 = vmatpush1.msra.mxu0 %v87
    %228 = vmatprep.subr.mxu0 %v90
    %229 = vmatpush1.msra.mxu0 %v89
    %230 = vmatprep.subr.mxu0 %v92
    %231 = vmatpush1.msra.mxu0 %v91
    %232 = vmatprep.subr.mxu0 %v94
    %233 = vmatpush1.msra.mxu0 %v93
    %234 = vmatprep.subr.mxu0 %v96
    %235 = vmatpush1.msra.mxu0 %v95
    %236 = vmatprep.subr.mxu0 %v98
    %237 = vmatpush1.msra.mxu0 %v97
    %238 = vmatprep.subr.mxu0 %v100
    %239 = vmatpush1.msra.mxu0 %v99
    %240 = vmatprep.subr.mxu0 %v102
    %241 = vmatpush1.msra.mxu0 %v101
    %242 = vmatprep.subr.mxu0 %v104
    %243 = vmatpush1.msra.mxu0 %v103
    %244 = vmatprep.subr.mxu0 %v106
    %245 = vmatpush1.msra.mxu0 %v105
    %246 = vmatprep.subr.mxu0 %v108
    %247 = vmatpush1.msra.mxu0 %v107
    %248 = vmatprep.subr.mxu0 %v110
    %249 = vmatpush1.msra.mxu0 %v109
    %250 = vmatprep.subr.mxu0 %v112
    %251 = vmatpush1.msra.mxu0 %v111
    %252 = vmatprep.subr.mxu0 %v114
    %253 = vmatpush1.msra.mxu0 %v113
    %254 = vmatprep.subr.mxu0 %v116
    %255 = vmatpush1.msra.mxu0 %v115
    %256 = vmatprep.subr.mxu0 %v118
    %257 = vmatpush1.msra.mxu0 %v117
    %258 = vmatprep.subr.mxu0 %v120
    %259 = vmatpush1.msra.mxu0 %v119
    %260 = vmatprep.subr.mxu0 %v122
    %261 = vmatpush1.msra.mxu0 %v121
    %262 = vmatprep.subr.mxu0 %v124
    %263 = vmatpush1.msra.mxu0 %v123
    %264 = vmatprep.subr.mxu0 %v126
    %265 = vmatpush1.msra.mxu0 %v125
    %266 = vmatprep.subr.mxu0 %v128
    %267 = vmatpush1.msra.mxu0 %v127
    %268 = vmatprep.subr.mxu0 %v130
    %269 = vmatpush1.msra.mxu0 %v129
    %270 = vmatprep.subr.mxu0 %v132
    %271 = vmatpush1.msra.mxu0 %v131
    %272 = vmatprep.subr.mxu0 %v134
    %273 = vmatpush1.msra.mxu0 %v133
    %274 = vmatprep.subr.mxu0 %v136
    %275 = vmatpush1.msra.mxu0 %v135
    %276 = vmatprep.subr.mxu0 %v138
    %277 = vmatpush1.msra.mxu0 %v137
    %278 = vmatprep.subr.mxu0 %v140
    %279 = vmatpush1.msra.mxu0 %v139
    %280 = vmatprep.subr.mxu0 %v142
    %281 = vmatpush1.msra.mxu0 %v141
    %282 = vmatprep.subr.mxu0 %v144
    %283 = vmatpush1.msra.mxu0 %v143
    %284 = vmatprep.subr.mxu0 %v146
    %285 = vmatpush1.msra.mxu0 %v145
    %286 = vmatprep.subr.mxu0 %v148
    %287 = vmatpush1.msra.mxu0 %v147
    %288 = vmatprep.mubr.f32.mxu0 %v223
    %289 = vmatmul.mubr.f32.gmra.mrb[0].mxu0 %v222
    %v290 = vpop.f32.mrb[0].mxu0
    %v291 = vadd.f32 1e-05, %v290
    %v292 = vpop.f32.mrb[0].mxu0
    %v293 = vadd.f32 1e-05, %v292
    %294 = vdwg.mxu0
    %v295 = vrsqrt.pop %v291
    %v296 = vrsqrt.pop %v293
    %v297 = vld [vmem:[%s2] sm:$0x3]
    %v299 = vlaneseq
    %v300 = vshrl.u32 %v299, 7
    %v301 = vsub.s32 0, %v300
    %v302 = vrot.slane %v297, %v301
    %v303 = vlaneseq
    %v304 = vshrl.u32 %v303, 7
    %v305 = vsub.s32 1, %v304
    %v306 = vrot.slane %v297, %v305
    %v309 = vmul.f32 %v295, %v302
    %v310 = vmul.f32 %v296, %v306
    %v311 = vmul.f32 %v220, %v309
    %v312 = vmul.f32 %v221, %v310
    %v313 = vld [vmem:[%s3] sm:$0x3]
    %v315 = vlaneseq
    %v316 = vshrl.u32 %v315, 7
    %v317 = vsub.s32 0, %v316
    %v318 = vrot.slane %v313, %v317
    %v319 = vlaneseq
    %v320 = vshrl.u32 %v319, 7
    %v321 = vsub.s32 1, %v320
    %v322 = vrot.slane %v313, %v321
    %v325 = vadd.f32 %v311, %v318
    %v326 = vadd.f32 %v312, %v322
    %v327 = vld [vmem:[#allocation7] sm:$0xff]
    %v328 = vld [vmem:[#allocation7 + $0x8] sm:$0xff]
    %v329 = vld [vmem:[#allocation7 + $0x10] sm:$0xff]
    %v330 = vld [vmem:[#allocation7 + $0x18] sm:$0xff]
    %v331 = vld [vmem:[#allocation7 + $0x20] sm:$0xff]
    %v332 = vld [vmem:[#allocation7 + $0x28] sm:$0xff]
    %v333 = vld [vmem:[#allocation7 + $0x30] sm:$0xff]
    %v334 = vld [vmem:[#allocation7 + $0x38] sm:$0xff]
    %v335 = vld [vmem:[#allocation7 + $0x40] sm:$0xff]
    %v336 = vld [vmem:[#allocation7 + $0x48] sm:$0xff]
    %v337 = vld [vmem:[#allocation7 + $0x50] sm:$0xff]
    %v338 = vld [vmem:[#allocation7 + $0x58] sm:$0xff]
    %v339 = vld [vmem:[#allocation7 + $0x60] sm:$0xff]
    %v340 = vld [vmem:[#allocation7 + $0x68] sm:$0xff]
    %v341 = vld [vmem:[#allocation7 + $0x70] sm:$0xff]
    %v342 = vld [vmem:[#allocation7 + $0x78] sm:$0xff]
    %v343 = vld [vmem:[#allocation7 + $0x80] sm:$0xff]
    %v344 = vld [vmem:[#allocation7 + $0x88] sm:$0xff]
    %v345 = vld [vmem:[#allocation7 + $0x90] sm:$0xff]
    %v346 = vld [vmem:[#allocation7 + $0x98] sm:$0xff]
    %v347 = vld [vmem:[#allocation7 + $0xa0] sm:$0xff]
    %v348 = vld [vmem:[#allocation7 + $0xa8] sm:$0xff]
    %v349 = vld [vmem:[#allocation7 + $0xb0] sm:$0xff]
    %v350 = vld [vmem:[#allocation7 + $0xb8] sm:$0xff]
    %v351 = vld [vmem:[#allocation7 + $0xc0] sm:$0xff]
    %v352 = vld [vmem:[#allocation7 + $0xc8] sm:$0xff]
    %v353 = vld [vmem:[#allocation7 + $0xd0] sm:$0xff]
    %v354 = vld [vmem:[#allocation7 + $0xd8] sm:$0xff]
    %v355 = vld [vmem:[#allocation7 + $0xe0] sm:$0xff]
    %v356 = vld [vmem:[#allocation7 + $0xe8] sm:$0xff]
    %v357 = vld [vmem:[#allocation7 + $0xf0] sm:$0xff]
    %v358 = vld [vmem:[#allocation7 + $0xf8] sm:$0xff]
    %v359 = vld [vmem:[#allocation7 + $0x100] sm:$0xff]
    %v360 = vld [vmem:[#allocation7 + $0x108] sm:$0xff]
    %v361 = vld [vmem:[#allocation7 + $0x110] sm:$0xff]
    %v362 = vld [vmem:[#allocation7 + $0x118] sm:$0xff]
    %v363 = vld [vmem:[#allocation7 + $0x120] sm:$0xff]
    %v364 = vld [vmem:[#allocation7 + $0x128] sm:$0xff]
    %v365 = vld [vmem:[#allocation7 + $0x130] sm:$0xff]
    %v366 = vld [vmem:[#allocation7 + $0x138] sm:$0xff]
    %v367 = vld [vmem:[#allocation7 + $0x140] sm:$0xff]
    %v368 = vld [vmem:[#allocation7 + $0x148] sm:$0xff]
    %v369 = vld [vmem:[#allocation7 + $0x150] sm:$0xff]
    %v370 = vld [vmem:[#allocation7 + $0x158] sm:$0xff]
    %v371 = vld [vmem:[#allocation7 + $0x160] sm:$0xff]
    %v372 = vld [vmem:[#allocation7 + $0x168] sm:$0xff]
    %v373 = vld [vmem:[#allocation7 + $0x170] sm:$0xff]
    %v374 = vld [vmem:[#allocation7 + $0x178] sm:$0xff]
    %v375 = vld [vmem:[#allocation7 + $0x180] sm:$0xff]
    %v376 = vld [vmem:[#allocation7 + $0x188] sm:$0xff]
    %v377 = vld [vmem:[#allocation7 + $0x190] sm:$0xff]
    %v378 = vld [vmem:[#allocation7 + $0x198] sm:$0xff]
    %v379 = vld [vmem:[#allocation7 + $0x1a0] sm:$0xff]
    %v380 = vld [vmem:[#allocation7 + $0x1a8] sm:$0xff]
    %v381 = vld [vmem:[#allocation7 + $0x1b0] sm:$0xff]
    %v382 = vld [vmem:[#allocation7 + $0x1b8] sm:$0xff]
    %v383 = vld [vmem:[#allocation7 + $0x1c0] sm:$0xff]
    %v384 = vld [vmem:[#allocation7 + $0x1c8] sm:$0xff]
    %v385 = vld [vmem:[#allocation7 + $0x1d0] sm:$0xff]
    %v386 = vld [vmem:[#allocation7 + $0x1d8] sm:$0xff]
    %v387 = vld [vmem:[#allocation7 + $0x1e0] sm:$0xff]
    %v388 = vld [vmem:[#allocation7 + $0x1e8] sm:$0xff]
    %v389 = vld [vmem:[#allocation7 + $0x1f0] sm:$0xff]
    %v390 = vld [vmem:[#allocation7 + $0x1f8] sm:$0xff]
    %v391 = vld [vmem:[#allocation7 + $0x200] sm:$0xff]
    %v392 = vld [vmem:[#allocation7 + $0x208] sm:$0xff]
    %v393 = vld [vmem:[#allocation7 + $0x210] sm:$0xff]
    %v394 = vld [vmem:[#allocation7 + $0x218] sm:$0xff]
    %v395 = vld [vmem:[#allocation7 + $0x220] sm:$0xff]
    %v396 = vld [vmem:[#allocation7 + $0x228] sm:$0xff]
    %v397 = vld [vmem:[#allocation7 + $0x230] sm:$0xff]
    %v398 = vld [vmem:[#allocation7 + $0x238] sm:$0xff]
    %v399 = vld [vmem:[#allocation7 + $0x240] sm:$0xff]
    %v400 = vld [vmem:[#allocation7 + $0x248] sm:$0xff]
    %v401 = vld [vmem:[#allocation7 + $0x250] sm:$0xff]
    %v402 = vld [vmem:[#allocation7 + $0x258] sm:$0xff]
    %v403 = vld [vmem:[#allocation7 + $0x260] sm:$0xff]
    %v404 = vld [vmem:[#allocation7 + $0x268] sm:$0xff]
    %v405 = vld [vmem:[#allocation7 + $0x270] sm:$0xff]
    %v406 = vld [vmem:[#allocation7 + $0x278] sm:$0xff]
    %v407 = vld [vmem:[#allocation7 + $0x280] sm:$0xff]
    %v408 = vld [vmem:[#allocation7 + $0x288] sm:$0xff]
    %v409 = vld [vmem:[#allocation7 + $0x290] sm:$0xff]
    %v410 = vld [vmem:[#allocation7 + $0x298] sm:$0xff]
    %v411 = vld [vmem:[#allocation7 + $0x2a0] sm:$0xff]
    %v412 = vld [vmem:[#allocation7 + $0x2a8] sm:$0xff]
    %v413 = vld [vmem:[#allocation7 + $0x2b0] sm:$0xff]
    %v414 = vld [vmem:[#allocation7 + $0x2b8] sm:$0xff]
    %v415 = vld [vmem:[#allocation7 + $0x2c0] sm:$0xff]
    %v416 = vld [vmem:[#allocation7 + $0x2c8] sm:$0xff]
    %v417 = vld [vmem:[#allocation7 + $0x2d0] sm:$0xff]
    %v418 = vld [vmem:[#allocation7 + $0x2d8] sm:$0xff]
    %v419 = vld [vmem:[#allocation7 + $0x2e0] sm:$0xff]
    %v420 = vld [vmem:[#allocation7 + $0x2e8] sm:$0xff]
    %v421 = vld [vmem:[#allocation7 + $0x2f0] sm:$0xff]
    %v422 = vld [vmem:[#allocation7 + $0x2f8] sm:$0xff]
    %v423 = vld [vmem:[#allocation7 + $0x300] sm:$0xff]
    %v424 = vld [vmem:[#allocation7 + $0x308] sm:$0xff]
    %v425 = vld [vmem:[#allocation7 + $0x310] sm:$0xff]
    %v426 = vld [vmem:[#allocation7 + $0x318] sm:$0xff]
    %v427 = vld [vmem:[#allocation7 + $0x320] sm:$0xff]
    %v428 = vld [vmem:[#allocation7 + $0x328] sm:$0xff]
    %v429 = vld [vmem:[#allocation7 + $0x330] sm:$0xff]
    %v430 = vld [vmem:[#allocation7 + $0x338] sm:$0xff]
    %v431 = vld [vmem:[#allocation7 + $0x340] sm:$0xff]
    %v432 = vld [vmem:[#allocation7 + $0x348] sm:$0xff]
    %v433 = vld [vmem:[#allocation7 + $0x350] sm:$0xff]
    %v434 = vld [vmem:[#allocation7 + $0x358] sm:$0xff]
    %v435 = vld [vmem:[#allocation7 + $0x360] sm:$0xff]
    %v436 = vld [vmem:[#allocation7 + $0x368] sm:$0xff]
    %v437 = vld [vmem:[#allocation7 + $0x370] sm:$0xff]
    %v438 = vld [vmem:[#allocation7 + $0x378] sm:$0xff]
    %v439 = vld [vmem:[#allocation7 + $0x380] sm:$0xff]
    %v440 = vld [vmem:[#allocation7 + $0x388] sm:$0xff]
    %v441 = vld [vmem:[#allocation7 + $0x390] sm:$0xff]
    %v442 = vld [vmem:[#allocation7 + $0x398] sm:$0xff]
    %v443 = vld [vmem:[#allocation7 + $0x3a0] sm:$0xff]
    %v444 = vld [vmem:[#allocation7 + $0x3a8] sm:$0xff]
    %v445 = vld [vmem:[#allocation7 + $0x3b0] sm:$0xff]
    %v446 = vld [vmem:[#allocation7 + $0x3b8] sm:$0xff]
    %v447 = vld [vmem:[#allocation7 + $0x3c0] sm:$0xff]
    %v448 = vld [vmem:[#allocation7 + $0x3c8] sm:$0xff]
    %v449 = vld [vmem:[#allocation7 + $0x3d0] sm:$0xff]
    %v450 = vld [vmem:[#allocation7 + $0x3d8] sm:$0xff]
    %v451 = vld [vmem:[#allocation7 + $0x3e0] sm:$0xff]
    %v452 = vld [vmem:[#allocation7 + $0x3e8] sm:$0xff]
    %v453 = vld [vmem:[#allocation7 + $0x3f0] sm:$0xff]
    %v454 = vld [vmem:[#allocation7 + $0x3f8] sm:$0xff]
    %v455 = vld [vmem:[%s5] sm:$0xf]
    %v457 = vlaneseq
    %v458 = vshrl.u32 %v457, 7
    %v459 = vsub.s32 0, %v458
    %v460 = vrot.slane %v455, %v459
    %v461 = vlaneseq
    %v462 = vshrl.u32 %v461, 7
    %v463 = vsub.s32 1, %v462
    %v464 = vrot.slane %v455, %v463
    %v465 = vlaneseq
    %v466 = vshrl.u32 %v465, 7
    %v467 = vsub.s32 2, %v466
    %v468 = vrot.slane %v455, %v467
    %v469 = vlaneseq
    %v470 = vshrl.u32 %v469, 7
    %v471 = vsub.s32 3, %v470
    %v472 = vrot.slane %v455, %v471
    %477 = vmatprep.subr.mxu0 %v328
    %478 = vmatpush1.msra.mxu0 %v327
    %479 = vmatprep.subr.mxu0 %v332
    %480 = vmatpush1.msra.mxu0 %v331
    %481 = vmatprep.subr.mxu0 %v336
    %482 = vmatpush1.msra.mxu0 %v335
    %483 = vmatprep.subr.mxu0 %v340
    %484 = vmatpush1.msra.mxu0 %v339
    %485 = vmatprep.subr.mxu0 %v344
    %486 = vmatpush1.msra.mxu0 %v343
    %487 = vmatprep.subr.mxu0 %v348
    %488 = vmatpush1.msra.mxu0 %v347
    %489 = vmatprep.subr.mxu0 %v352
    %490 = vmatpush1.msra.mxu0 %v351
    %491 = vmatprep.subr.mxu0 %v356
    %492 = vmatpush1.msra.mxu0 %v355
    %493 = vmatprep.subr.mxu0 %v360
    %494 = vmatpush1.msra.mxu0 %v359
    %495 = vmatprep.subr.mxu0 %v364
    %496 = vmatpush1.msra.mxu0 %v363
    %497 = vmatprep.subr.mxu0 %v368
    %498 = vmatpush1.msra.mxu0 %v367
    %499 = vmatprep.subr.mxu0 %v372
    %500 = vmatpush1.msra.mxu0 %v371
    %501 = vmatprep.subr.mxu0 %v376
    %502 = vmatpush1.msra.mxu0 %v375
    %503 = vmatprep.subr.mxu0 %v380
    %504 = vmatpush1.msra.mxu0 %v379
    %505 = vmatprep.subr.mxu0 %v384
    %506 = vmatpush1.msra.mxu0 %v383
    %507 = vmatprep.subr.mxu0 %v388
    %508 = vmatpush1.msra.mxu0 %v387
    %509 = vmatprep.subr.mxu0 %v392
    %510 = vmatpush1.msra.mxu0 %v391
    %511 = vmatprep.subr.mxu0 %v396
    %512 = vmatpush1.msra.mxu0 %v395
    %513 = vmatprep.subr.mxu0 %v400
    %514 = vmatpush1.msra.mxu0 %v399
    %515 = vmatprep.subr.mxu0 %v404
    %516 = vmatpush1.msra.mxu0 %v403
    %517 = vmatprep.subr.mxu0 %v408
    %518 = vmatpush1.msra.mxu0 %v407
    %519 = vmatprep.subr.mxu0 %v412
    %520 = vmatpush1.msra.mxu0 %v411
    %521 = vmatprep.subr.mxu0 %v416
    %522 = vmatpush1.msra.mxu0 %v415
    %523 = vmatprep.subr.mxu0 %v420
    %524 = vmatpush1.msra.mxu0 %v419
    %525 = vmatprep.subr.mxu0 %v424
    %526 = vmatpush1.msra.mxu0 %v423
    %527 = vmatprep.subr.mxu0 %v428
    %528 = vmatpush1.msra.mxu0 %v427
    %529 = vmatprep.subr.mxu0 %v432
    %530 = vmatpush1.msra.mxu0 %v431
    %531 = vmatprep.subr.mxu0 %v436
    %532 = vmatpush1.msra.mxu0 %v435
    %533 = vmatprep.subr.mxu0 %v440
    %534 = vmatpush1.msra.mxu0 %v439
    %535 = vmatprep.subr.mxu0 %v444
    %536 = vmatpush1.msra.mxu0 %v443
    %537 = vmatprep.subr.mxu0 %v448
    %538 = vmatpush1.msra.mxu0 %v447
    %539 = vmatprep.subr.mxu0 %v452
    %540 = vmatpush1.msra.mxu0 %v451
    %541 = vmatprep.mubr.f32.mxu0 %v326
    %542 = vmatmul.mubr.f32.gmra.mrb[0].mxu0 %v325
    %v543 = vpop.f32.mrb[0].mxu0
    %v544 = vadd.f32 %v460, %v543
    %v545 = vpop.f32.mrb[0].mxu0
    %v546 = vadd.f32 %v464, %v545
    %547 = vdwg.mxu0
    %548 = vmatprep.subr.mxu0 %v330
    %549 = vmatpush1.msra.mxu0 %v329
    %550 = vmatprep.subr.mxu0 %v334
    %551 = vmatpush1.msra.mxu0 %v333
    %552 = vmatprep.subr.mxu0 %v338
    %553 = vmatpush1.msra.mxu0 %v337
    %554 = vmatprep.subr.mxu0 %v342
    %555 = vmatpush1.msra.mxu0 %v341
    %556 = vmatprep.subr.mxu0 %v346
    %557 = vmatpush1.msra.mxu0 %v345
    %558 = vmatprep.subr.mxu0 %v350
    %559 = vmatpush1.msra.mxu0 %v349
    %560 = vmatprep.subr.mxu0 %v354
    %561 = vmatpush1.msra.mxu0 %v353
    %562 = vmatprep.subr.mxu0 %v358
    %563 = vmatpush1.msra.mxu0 %v357
    %564 = vmatprep.subr.mxu0 %v362
    %565 = vmatpush1.msra.mxu0 %v361
    %566 = vmatprep.subr.mxu0 %v366
    %567 = vmatpush1.msra.mxu0 %v365
    %568 = vmatprep.subr.mxu0 %v370
    %569 = vmatpush1.msra.mxu0 %v369
    %570 = vmatprep.subr.mxu0 %v374
    %571 = vmatpush1.msra.mxu0 %v373
    %572 = vmatprep.subr.mxu0 %v378
    %573 = vmatpush1.msra.mxu0 %v377
    %574 = vmatprep.subr.mxu0 %v382
    %575 = vmatpush1.msra.mxu0 %v381
    %576 = vmatprep.subr.mxu0 %v386
    %577 = vmatpush1.msra.mxu0 %v385
    %578 = vmatprep.subr.mxu0 %v390
    %579 = vmatpush1.msra.mxu0 %v389
    %580 = vmatprep.subr.mxu0 %v394
    %581 = vmatpush1.msra.mxu0 %v393
    %582 = vmatprep.subr.mxu0 %v398
    %583 = vmatpush1.msra.mxu0 %v397
    %584 = vmatprep.subr.mxu0 %v402
    %585 = vmatpush1.msra.mxu0 %v401
    %586 = vmatprep.subr.mxu0 %v406
    %587 = vmatpush1.msra.mxu0 %v405
    %588 = vmatprep.subr.mxu0 %v410
    %589 = vmatpush1.msra.mxu0 %v409
    %590 = vmatprep.subr.mxu0 %v414
    %591 = vmatpush1.msra.mxu0 %v413
    %592 = vmatprep.subr.mxu0 %v418
    %593 = vmatpush1.msra.mxu0 %v417
    %594 = vmatprep.subr.mxu0 %v422
    %595 = vmatpush1.msra.mxu0 %v421
    %596 = vmatprep.subr.mxu0 %v426
    %597 = vmatpush1.msra.mxu0 %v425
    %598 = vmatprep.subr.mxu0 %v430
    %599 = vmatpush1.msra.mxu0 %v429
    %600 = vmatprep.subr.mxu0 %v434
    %601 = vmatpush1.msra.mxu0 %v433
    %602 = vmatprep.subr.mxu0 %v438
    %603 = vmatpush1.msra.mxu0 %v437
    %604 = vmatprep.subr.mxu0 %v442
    %605 = vmatpush1.msra.mxu0 %v441
    %606 = vmatprep.subr.mxu0 %v446
    %607 = vmatpush1.msra.mxu0 %v445
    %608 = vmatprep.subr.mxu0 %v450
    %609 = vmatpush1.msra.mxu0 %v449
    %610 = vmatprep.subr.mxu0 %v454
    %611 = vmatpush1.msra.mxu0 %v453
    %612 = vmatprep.mubr.f32.mxu0 %v326
    %613 = vmatmul.mubr.f32.gmra.mrb[0].mxu0 %v325
    %v614 = vpop.f32.mrb[0].mxu0
    %v615 = vadd.f32 %v468, %v614
    %v616 = vpop.f32.mrb[0].mxu0
    %v617 = vadd.f32 %v472, %v616
    %618 = vdwg.mxu0
    %v619 = vmax.f32 %v544, 0.0
    %v620 = vmax.f32 %v546, 0.0
    %v621 = vmax.f32 %v615, 0.0
    %v622 = vmax.f32 %v617, 0.0
    %v623 = vld [vmem:[#allocation8] sm:$0xff]
    %v624 = vld [vmem:[#allocation8 + $0x8] sm:$0xff]
    %v625 = vld [vmem:[#allocation8 + $0x10] sm:$0xff]
    %v626 = vld [vmem:[#allocation8 + $0x18] sm:$0xff]
    %v627 = vld [vmem:[#allocation8 + $0x20] sm:$0xff]
    %v628 = vld [vmem:[#allocation8 + $0x28] sm:$0xff]
    %v629 = vld [vmem:[#allocation8 + $0x30] sm:$0xff]
    %v630 = vld [vmem:[#allocation8 + $0x38] sm:$0xff]
    %v631 = vld [vmem:[#allocation8 + $0x40] sm:$0xff]
    %v632 = vld [vmem:[#allocation8 + $0x48] sm:$0xff]
    %v633 = vld [vmem:[#allocation8 + $0x50] sm:$0xff]
    %v634 = vld [vmem:[#allocation8 + $0x58] sm:$0xff]
    %v635 = vld [vmem:[#allocation8 + $0x60] sm:$0xff]
    %v636 = vld [vmem:[#allocation8 + $0x68] sm:$0xff]
    %v637 = vld [vmem:[#allocation8 + $0x70] sm:$0xff]
    %v638 = vld [vmem:[#allocation8 + $0x78] sm:$0xff]
    %v639 = vld [vmem:[#allocation8 + $0x80] sm:$0xff]
    %v640 = vld [vmem:[#allocation8 + $0x88] sm:$0xff]
    %v641 = vld [vmem:[#allocation8 + $0x90] sm:$0xff]
    %v642 = vld [vmem:[#allocation8 + $0x98] sm:$0xff]
    %v643 = vld [vmem:[#allocation8 + $0xa0] sm:$0xff]
    %v644 = vld [vmem:[#allocation8 + $0xa8] sm:$0xff]
    %v645 = vld [vmem:[#allocation8 + $0xb0] sm:$0xff]
    %v646 = vld [vmem:[#allocation8 + $0xb8] sm:$0xff]
    %v647 = vld [vmem:[#allocation8 + $0xc0] sm:$0xff]
    %v648 = vld [vmem:[#allocation8 + $0xc8] sm:$0xff]
    %v649 = vld [vmem:[#allocation8 + $0xd0] sm:$0xff]
    %v650 = vld [vmem:[#allocation8 + $0xd8] sm:$0xff]
    %v651 = vld [vmem:[#allocation8 + $0xe0] sm:$0xff]
    %v652 = vld [vmem:[#allocation8 + $0xe8] sm:$0xff]
    %v653 = vld [vmem:[#allocation8 + $0xf0] sm:$0xff]
    %v654 = vld [vmem:[#allocation8 + $0xf8] sm:$0xff]
    %v655 = vld [vmem:[#allocation8 + $0x100] sm:$0xff]
    %v656 = vld [vmem:[#allocation8 + $0x108] sm:$0xff]
    %v657 = vld [vmem:[#allocation8 + $0x110] sm:$0xff]
    %v658 = vld [vmem:[#allocation8 + $0x118] sm:$0xff]
    %v659 = vld [vmem:[#allocation8 + $0x120] sm:$0xff]
    %v660 = vld [vmem:[#allocation8 + $0x128] sm:$0xff]
    %v661 = vld [vmem:[#allocation8 + $0x130] sm:$0xff]
    %v662 = vld [vmem:[#allocation8 + $0x138] sm:$0xff]
    %v663 = vld [vmem:[#allocation8 + $0x140] sm:$0xff]
    %v664 = vld [vmem:[#allocation8 + $0x148] sm:$0xff]
    %v665 = vld [vmem:[#allocation8 + $0x150] sm:$0xff]
    %v666 = vld [vmem:[#allocation8 + $0x158] sm:$0xff]
    %v667 = vld [vmem:[#allocation8 + $0x160] sm:$0xff]
    %v668 = vld [vmem:[#allocation8 + $0x168] sm:$0xff]
    %v669 = vld [vmem:[#allocation8 + $0x170] sm:$0xff]
    %v670 = vld [vmem:[#allocation8 + $0x178] sm:$0xff]
    %v671 = vld [vmem:[#allocation8 + $0x180] sm:$0xff]
    %v672 = vld [vmem:[#allocation8 + $0x188] sm:$0xff]
    %v673 = vld [vmem:[#allocation8 + $0x190] sm:$0xff]
    %v674 = vld [vmem:[#allocation8 + $0x198] sm:$0xff]
    %v675 = vld [vmem:[#allocation8 + $0x1a0] sm:$0xff]
    %v676 = vld [vmem:[#allocation8 + $0x1a8] sm:$0xff]
    %v677 = vld [vmem:[#allocation8 + $0x1b0] sm:$0xff]
    %v678 = vld [vmem:[#allocation8 + $0x1b8] sm:$0xff]
    %v679 = vld [vmem:[#allocation8 + $0x1c0] sm:$0xff]
    %v680 = vld [vmem:[#allocation8 + $0x1c8] sm:$0xff]
    %v681 = vld [vmem:[#allocation8 + $0x1d0] sm:$0xff]
    %v682 = vld [vmem:[#allocation8 + $0x1d8] sm:$0xff]
    %v683 = vld [vmem:[#allocation8 + $0x1e0] sm:$0xff]
    %v684 = vld [vmem:[#allocation8 + $0x1e8] sm:$0xff]
    %v685 = vld [vmem:[#allocation8 + $0x1f0] sm:$0xff]
    %v686 = vld [vmem:[#allocation8 + $0x1f8] sm:$0xff]
    %v687 = vld [vmem:[%s7] sm:$0x1]
    %v689 = vlaneseq
    %v690 = vshrl.u32 %v689, 7
    %v691 = vsub.s32 0, %v690
    %v692 = vrot.slane %v687, %v691
    %694 = vmatprep.subr.mxu0 0.0
    %695 = vmatpush1.msra.mxu0 %v623
    %696 = vmatprep.subr.mxu0 0.0
    %697 = vmatpush1.msra.mxu0 %v624
    %698 = vmatprep.subr.mxu0 0.0
    %699 = vmatpush1.msra.mxu0 %v625
    %700 = vmatprep.subr.mxu0 0.0
    %701 = vmatpush1.msra.mxu0 %v626
    %702 = vmatprep.subr.mxu0 0.0
    %703 = vmatpush1.msra.mxu0 %v627
    %704 = vmatprep.subr.mxu0 0.0
    %705 = vmatpush1.msra.mxu0 %v628
    %706 = vmatprep.subr.mxu0 0.0
    %707 = vmatpush1.msra.mxu0 %v629
    %708 = vmatprep.subr.mxu0 0.0
    %709 = vmatpush1.msra.mxu0 %v630
    %710 = vmatprep.subr.mxu0 0.0
    %711 = vmatpush1.msra.mxu0 %v631
    %712 = vmatprep.subr.mxu0 0.0
    %713 = vmatpush1.msra.mxu0 %v632
    %714 = vmatprep.subr.mxu0 0.0
    %715 = vmatpush1.msra.mxu0 %v633
    %716 = vmatprep.subr.mxu0 0.0
    %717 = vmatpush1.msra.mxu0 %v634
    %718 = vmatprep.subr.mxu0 0.0
    %719 = vmatpush1.msra.mxu0 %v635
    %720 = vmatprep.subr.mxu0 0.0
    %721 = vmatpush1.msra.mxu0 %v636
    %722 = vmatprep.subr.mxu0 0.0
    %723 = vmatpush1.msra.mxu0 %v637
    %724 = vmatprep.subr.mxu0 0.0
    %725 = vmatpush1.msra.mxu0 %v638
    %726 = vmatprep.subr.mxu0 0.0
    %727 = vmatpush1.msra.mxu0 %v639
    %728 = vmatprep.subr.mxu0 0.0
    %729 = vmatpush1.msra.mxu0 %v640
    %730 = vmatprep.subr.mxu0 0.0
    %731 = vmatpush1.msra.mxu0 %v641
    %732 = vmatprep.subr.mxu0 0.0
    %733 = vmatpush1.msra.mxu0 %v642
    %734 = vmatprep.subr.mxu0 0.0
    %735 = vmatpush1.msra.mxu0 %v643
    %736 = vmatprep.subr.mxu0 0.0
    %737 = vmatpush1.msra.mxu0 %v644
    %738 = vmatprep.subr.mxu0 0.0
    %739 = vmatpush1.msra.mxu0 %v645
    %740 = vmatprep.subr.mxu0 0.0
    %741 = vmatpush1.msra.mxu0 %v646
    %742 = vmatprep.subr.mxu0 0.0
    %743 = vmatpush1.msra.mxu0 %v647
    %744 = vmatprep.subr.mxu0 0.0
    %745 = vmatpush1.msra.mxu0 %v648
    %746 = vmatprep.subr.mxu0 0.0
    %747 = vmatpush1.msra.mxu0 %v649
    %748 = vmatprep.subr.mxu0 0.0
    %749 = vmatpush1.msra.mxu0 %v650
    %750 = vmatprep.subr.mxu0 0.0
    %751 = vmatpush1.msra.mxu0 %v651
    %752 = vmatprep.subr.mxu0 0.0
    %753 = vmatpush1.msra.mxu0 %v652
    %754 = vmatprep.subr.mxu0 0.0
    %755 = vmatpush1.msra.mxu0 %v653
    %756 = vmatprep.subr.mxu0 0.0
    %757 = vmatpush1.msra.mxu0 %v654
    %758 = vmatprep.mubr.f32.mxu0 %v620
    %759 = vmatmul.mubr.f32.gmra.mrb[0].mxu0 %v619
    %v760 = vpop.f32.mrb[0].mxu0
    %v761 = vadd.f32 %v692, %v760
    %v762 = vpop.f32.mrb[0].mxu0
    %763 = vdwg.mxu0
    %764 = vmatprep.subr.mxu0 0.0
    %765 = vmatpush1.msra.mxu0 %v655
    %766 = vmatprep.subr.mxu0 0.0
    %767 = vmatpush1.msra.mxu0 %v656
    %768 = vmatprep.subr.mxu0 0.0
    %769 = vmatpush1.msra.mxu0 %v657
    %770 = vmatprep.subr.mxu0 0.0
    %771 = vmatpush1.msra.mxu0 %v658
    %772 = vmatprep.subr.mxu0 0.0
    %773 = vmatpush1.msra.mxu0 %v659
    %774 = vmatprep.subr.mxu0 0.0
    %775 = vmatpush1.msra.mxu0 %v660
    %776 = vmatprep.subr.mxu0 0.0
    %777 = vmatpush1.msra.mxu0 %v661
    %778 = vmatprep.subr.mxu0 0.0
    %779 = vmatpush1.msra.mxu0 %v662
    %780 = vmatprep.subr.mxu0 0.0
    %781 = vmatpush1.msra.mxu0 %v663
    %782 = vmatprep.subr.mxu0 0.0
    %783 = vmatpush1.msra.mxu0 %v664
    %784 = vmatprep.subr.mxu0 0.0
    %785 = vmatpush1.msra.mxu0 %v665
    %786 = vmatprep.subr.mxu0 0.0
    %787 = vmatpush1.msra.mxu0 %v666
    %788 = vmatprep.subr.mxu0 0.0
    %789 = vmatpush1.msra.mxu0 %v667
    %790 = vmatprep.subr.mxu0 0.0
    %791 = vmatpush1.msra.mxu0 %v668
    %792 = vmatprep.subr.mxu0 0.0
    %793 = vmatpush1.msra.mxu0 %v669
    %794 = vmatprep.subr.mxu0 0.0
    %795 = vmatpush1.msra.mxu0 %v670
    %796 = vmatprep.subr.mxu0 0.0
    %797 = vmatpush1.msra.mxu0 %v671
    %798 = vmatprep.subr.mxu0 0.0
    %799 = vmatpush1.msra.mxu0 %v672
    %800 = vmatprep.subr.mxu0 0.0
    %801 = vmatpush1.msra.mxu0 %v673
    %802 = vmatprep.subr.mxu0 0.0
    %803 = vmatpush1.msra.mxu0 %v674
    %804 = vmatprep.subr.mxu0 0.0
    %805 = vmatpush1.msra.mxu0 %v675
    %806 = vmatprep.subr.mxu0 0.0
    %807 = vmatpush1.msra.mxu0 %v676
    %808 = vmatprep.subr.mxu0 0.0
    %809 = vmatpush1.msra.mxu0 %v677
    %810 = vmatprep.subr.mxu0 0.0
    %811 = vmatpush1.msra.mxu0 %v678
    %812 = vmatprep.subr.mxu0 0.0
    %813 = vmatpush1.msra.mxu0 %v679
    %814 = vmatprep.subr.mxu0 0.0
    %815 = vmatpush1.msra.mxu0 %v680
    %816 = vmatprep.subr.mxu0 0.0
    %817 = vmatpush1.msra.mxu0 %v681
    %818 = vmatprep.subr.mxu0 0.0
    %819 = vmatpush1.msra.mxu0 %v682
    %820 = vmatprep.subr.mxu0 0.0
    %821 = vmatpush1.msra.mxu0 %v683
    %822 = vmatprep.subr.mxu0 0.0
    %823 = vmatpush1.msra.mxu0 %v684
    %824 = vmatprep.subr.mxu0 0.0
    %825 = vmatpush1.msra.mxu0 %v685
    %826 = vmatprep.subr.mxu0 0.0
    %827 = vmatpush1.msra.mxu0 %v686
    %828 = vmatprep.mubr.f32.mxu0 %v622
    %829 = vmatmul.mubr.f32.gmra.mrb[0].mxu0 %v621
    %v830 = vpop.f32.mrb[0].mxu0
    %v831 = vadd.f32 %v761, %v830
    %v832 = vpop.f32.mrb[0].mxu0
    %833 = vdwg.mxu0
    %v834 = vmax.f32 %v831, 0.0
    %835 = vst [vmem:[#allocation10] sm:$0xff] %v834
    // Predicated region
    $region50: #{tpu_custom_call.1} parent=1 // pred_check
      _
    $region51: #{tpu_custom_call.1} parent=1 // pred_check_branch
      %837 = sbr.rel (0) target = $region53
    $region52: #{tpu_custom_call.1} parent=1 // pred_region
      %s839 = ssub.s32 128, 128
      %840 = vsyncadd [#allocation4], %s839
      %s842 = sshll.u32 [#allocation10], 4
      %s843 = int_to_ptr.vmem [resolvable:$true] %s842
      %845 = dma.vmem_to_hbm [thread:$0]  %s843, 128, %s8, [#allocation4]
    $region53: #{tpu_custom_call.1} parent=1 // pred_fallthru
      _
    // Predicated region
    $region54: #{tpu_custom_call.1} parent=1 // pred_check
      _
    $region55: #{tpu_custom_call.1} parent=1 // pred_check_branch
      %847 = sbr.rel (0) target = $region57
    $region56: #{tpu_custom_call.1} parent=1 // pred_region
      %848 = dma.done [#allocation4], 128
    $region57: #{tpu_custom_call.1} parent=1 // pred_fallthru
      _
    %849 = vsyncpa [#allocation3], 1
    %850 = vsyncpa [#allocation6], 1
    %851 = vsyncpa [#allocation9], 1
    %852 = vsyncpa [#allocation4], 1

</llo_original>
